<compile_context>
chip_gen: v7x
topology: tpu7x:2x2x1
jax: 0.10.0
libtpu: 0.0.40
codegen_flags: <defaults>
</compile_context>

<pallas_src>
import math
import jax
import jax.numpy as jnp
from jax.experimental import pallas as pl
from jax.experimental.pallas import tpu as pltpu

_G = 8  # positions packed per output row -> output lane width = _G * hidden_dim


def _fourier_kernel(pos_ref, w_ref, phase_ref, out_ref):
    # pos_ref:   (tile_rows, G)     f32  -- G consecutive positions per row
    # w_ref:     (G, G*H)           f32  -- block-diagonal: w[j, j*H + h] = 2*pi*freq[h]
    # phase_ref: (1, G*H)           f32  -- 2*pi*phase tiled G times
    # out_ref:   (tile_rows, G*H)   f32
    #
    # MXU does the lane expansion + frequency scaling in one shot:
    #   arg[r, j*H + h] = pos[r, j] * 2*pi*freq[h]
    arg = jnp.dot(
        pos_ref[...],
        w_ref[...],
        preferred_element_type=jnp.float32,
        precision=jax.lax.Precision.HIGHEST,
    )
    out_ref[...] = jnp.cos(arg + phase_ref[...])


def _round_up(x, m):
    return ((x + m - 1) // m) * m


def fourier_encoding(pos, frequencies, phases, *, max_tile_rows=2048):
    """pos: (...B) any float/int dtype -> (...B, hidden_dim) float32."""
    hidden_dim = frequencies.shape[0]
    lead_shape = pos.shape
    n = math.prod(lead_shape)

    g = _G
    width = g * hidden_dim

    # Packed-row tiling: each packed row holds g consecutive positions.
    # Balance the rows across grid steps instead of padding to a full extra tile.
    n_rows = pl.cdiv(n, g)
    n_steps = pl.cdiv(n_rows, max_tile_rows)
    tile_rows = _round_up(pl.cdiv(n_rows, n_steps), 8)   # multiple of 8 sublanes
    n_rows_pad = n_steps * tile_rows
    n_pad = n_rows_pad * g

    pos_flat = pos.astype(jnp.float32).reshape(n)
    if n_pad != n:
        pos_flat = jnp.pad(pos_flat, (0, n_pad - n))      # padded rows are sliced off below
    pos2d = pos_flat.reshape(n_rows_pad, g)

    two_pi = jnp.float32(2.0 * math.pi)
    freq = frequencies.astype(jnp.float32)
    phase = phases.astype(jnp.float32)

    # Block-diagonal expansion matrix: W[j, j*H + h] = 2*pi*freq[h], zeros elsewhere.
    w = (jnp.eye(g, dtype=jnp.float32)[:, :, None]
         * (two_pi * freq)[None, None, :]).reshape(g, width)
    # Phase tile: phase_packed[0, j*H + h] = 2*pi*phase[h].
    phase_packed = jnp.tile(two_pi * phase, (g,)).reshape(1, width)

    grid = (n_steps,)
    out_packed = pl.pallas_call(
        _fourier_kernel,
        out_shape=jax.ShapeDtypeStruct((n_rows_pad, width), jnp.float32),
        grid_spec=pltpu.PrefetchScalarGridSpec(
            num_scalar_prefetch=0,
            grid=grid,
            in_specs=[
                pl.BlockSpec((tile_rows, g), lambda i: (i, 0)),
                pl.BlockSpec((g, width), lambda i: (0, 0)),
                pl.BlockSpec((1, width), lambda i: (0, 0)),
            ],
            out_specs=pl.BlockSpec((tile_rows, width), lambda i: (i, 0)),
        ),
        compiler_params=pltpu.CompilerParams(
            dimension_semantics=("parallel",)),
    )(pos2d, w, phase_packed)

    # Contiguous unpack: (n_rows_pad, g*H) -> (n_pad, H) -> slice -> (...B, H).
    out = out_packed.reshape(n_pad, hidden_dim)
    if n_pad != n:
        out = out[:n]
    return out.reshape(*lead_shape, hidden_dim)


if __name__ == "__main__":
    key = jax.random.PRNGKey(0)
    k_freq, k_phase, k_pos, k_pos2 = jax.random.split(key, 4)

    hidden_dim = 32
    # Buffers from __init__: frequencies ~ N(0,1), phases ~ U(0,1)
    frequencies = jax.random.normal(k_freq, (hidden_dim,), dtype=jnp.float32)
    phases = jax.random.uniform(k_phase, (hidden_dim,), dtype=jnp.float32)

    def reference(p):
        # Plain-JAX reference in the exact PyTorch rounding order.
        return jnp.cos(2.0 * math.pi
                       * (frequencies * p.astype(jnp.float32)[..., None] + phases))

    # Small case: batch=2, seq=16.
    pos = jax.random.uniform(k_pos, (2, 16), dtype=jnp.float32) * 10.0
    out = jax.block_until_ready(fourier_encoding(pos, frequencies, phases))
    ref = reference(pos)
    assert out.shape == (2, 16, hidden_dim), out.shape
    # Folding 2*pi into freq/phase and doing the scale on the MXU changes rounding order
    # slightly relative to the reference -> allow a few f32 ulps of the (large) cos argument.
    assert jnp.allclose(out, ref, atol=2e-4, rtol=2e-4), \
        float(jnp.max(jnp.abs(out - ref)))

    # Larger ragged case: exercises the multi-step grid, balanced tiling and padding/slicing.
    pos2 = jax.random.uniform(k_pos2, (3, 7001), dtype=jnp.float32) * 10.0
    out2 = jax.block_until_ready(fourier_encoding(pos2, frequencies, phases))
    ref2 = reference(pos2)
    assert out2.shape == (3, 7001, hidden_dim), out2.shape
    assert jnp.allclose(out2, ref2, atol=2e-4, rtol=2e-4), \
        float(jnp.max(jnp.abs(out2 - ref2)))

    print("KERNEL_OK")
</pallas_src>

<mosaic_0001>
module attributes {stable_mosaic.version = 11 : i64} {
  func.func @_fourier_kernel(%arg0: i32, %arg1: memref<8x8xf32, #tpu.memory_space<vmem>>, %arg2: memref<8x256xf32, #tpu.memory_space<vmem>>, %arg3: memref<1x256xf32, #tpu.memory_space<vmem>>, %arg4: memref<8x256xf32, #tpu.memory_space<vmem>>) attributes {dimension_semantics = [#tpu.dimension_semantics<parallel>], iteration_bounds = array<i64: 1>, scalar_prefetch = 0 : i64, scratch_operands = 0 : i64, tpu.core_type = #tpu.core_type<tc>, window_params = [{transform_indices = @transform_0, window_bounds = array<i64: 8, 8>}, {pipeline_mode = #tpu.pipeline_mode<synchronous>, transform_indices = @transform_1, window_bounds = array<i64: 8, 256>}, {pipeline_mode = #tpu.pipeline_mode<synchronous>, transform_indices = @transform_2, window_bounds = array<i64: 1, 256>}, {transform_indices = @transform_3, window_bounds = array<i64: 8, 256>}]} {
    %c0 = arith.constant 0 : index
    %c0_0 = arith.constant 0 : index
    %0 = vector.load %arg1[%c0, %c0_0] : memref<8x8xf32, #tpu.memory_space<vmem>>, vector<8x8xf32>
    %c0_1 = arith.constant 0 : index
    %c0_2 = arith.constant 0 : index
    %1 = vector.load %arg2[%c0_1, %c0_2] : memref<8x256xf32, #tpu.memory_space<vmem>>, vector<8x256xf32>
    %cst = arith.constant dense<0.000000e+00> : vector<8x256xf32>
    %2 = tpu.matmul %0, %1, %cst {dimension_numbers = #tpu.dot_dimension_numbers<[1], [0], [0], [1], [0, 0, 1, 1], [], []>, precision = #tpu.contract_precision<fp32>} : vector<8x8xf32>, vector<8x256xf32>, vector<8x256xf32> -> vector<8x256xf32>
    %c0_3 = arith.constant 0 : index
    %c0_4 = arith.constant 0 : index
    %3 = vector.load %arg3[%c0_3, %c0_4] : memref<1x256xf32, #tpu.memory_space<vmem>>, vector<1x256xf32>
    %4 = vector.broadcast %3 : vector<1x256xf32> to vector<8x256xf32>
    %5 = arith.addf %2, %4 : vector<8x256xf32>
    %6 = math.cos %5 : vector<8x256xf32>
    %c0_5 = arith.constant 0 : index
    %c0_6 = arith.constant 0 : index
    %7 = vector.load %arg4[%c0_5, %c0_6] : memref<8x256xf32, #tpu.memory_space<vmem>>, vector<8x256xf32>
    tpu.vector_store %arg4[%c0_5, %c0_6], %6 {strides = array<i32>} : memref<8x256xf32, #tpu.memory_space<vmem>>, vector<8x256xf32>,
    return
  }
  func.func @transform_0(%arg0: i32) -> (i32, i32) {
    %c0_i32 = arith.constant 0 : i32
    %c0_i32_0 = arith.constant 0 : i32
    return %arg0, %c0_i32 : i32, i32
  }
  func.func @transform_1(%arg0: i32) -> (i32, i32) {
    %c0_i32 = arith.constant 0 : i32
    %c0_i32_0 = arith.constant 0 : i32
    %c0_i32_1 = arith.constant 0 : i32
    return %c0_i32, %c0_i32_0 : i32, i32
  }
  func.func @transform_2(%arg0: i32) -> (i32, i32) {
    %c0_i32 = arith.constant 0 : i32
    %c0_i32_0 = arith.constant 0 : i32
    %c0_i32_1 = arith.constant 0 : i32
    return %c0_i32, %c0_i32_0 : i32, i32
  }
  func.func @transform_3(%arg0: i32) -> (i32, i32) {
    %c0_i32 = arith.constant 0 : i32
    %c0_i32_0 = arith.constant 0 : i32
    return %arg0, %c0_i32 : i32, i32
  }
}

</mosaic_0001>

<llo_original>
// kernel: tpu_custom_call.1
$region0: #{tpu_custom_call.1}
  #allocation0 [shape = 'u32[]', space=smem, size = 0x4, offset = 0x4, fixed_abs, tag = 'smem constant byte address 0x4 - core index']
  #allocation1 [shape = 'u32[144,128]{1,0:T(1,128)}', space=vmem, size = 0x12000, scoped, tag = 'internal scratch']
  %s0 = inlined_call_operand.hbm [shape: f32[8,8], index: 0, kind: input, shape index: {}]
  %s1 = inlined_call_operand.hbm [shape: f32[8,256], index: 1, kind: input, shape index: {}]
  %s2 = inlined_call_operand.vmem [shape: f32[1,256], index: 2, kind: input, shape index: {}]
  %s3 = inlined_call_operand.hbm [shape: f32[8,256], index: 3, kind: output, shape index: {}]
  %s4 = sld [smem:[#allocation0]]
  $region30: #{tpu_custom_call.1} parent=0
    _
  %s6 = ssub.s32 1, %s4
  %s7 = scalar_select 0, %s6, %s4
  $region1: #{tpu_custom_call.1} parent=0
    #allocation2 [shape = 'u8[4096]{0}', space=vmem, size = 0x1000, scoped, tag = 'input window, operand 0, single buffered']
    #allocation3 [shape = 's32[1]{0}', space=sflag, size = 0x4, scoped, tag = 'scoped memory for tpu_custom_call.1']
    #allocation4 [shape = 's32[1]{0}', space=sflag, size = 0x4, scoped, tag = 'scoped memory for tpu_custom_call.1']
    #allocation5 [shape = 'u8[8192]{0}', space=vmem, size = 0x2000, scoped, tag = 'input window, operand 1, single buffered']
    #allocation6 [shape = 's32[1]{0}', space=sflag, size = 0x4, scoped, tag = 'scoped memory for tpu_custom_call.1']
    #allocation7 [shape = 'u8[8192]{0}', space=vmem, size = 0x2000, scoped, tag = 'output window, operand 0, single buffered']
    %8 = vsyncpa [#allocation3], 0
    %9 = vsyncpa [#allocation6], 0
    %10 = vsyncpa [#allocation4], 0
    // Predicated region
    $region2: #{tpu_custom_call.1} parent=1 // pred_check
      _
    $region3: #{tpu_custom_call.1} parent=1 // pred_check_branch
      %12 = sbr.rel (0) target = $region5
    $region4: #{tpu_custom_call.1} parent=1 // pred_region
      %s14 = ssub.s32 128, 128
      %15 = vsyncadd [#allocation3], %s14
      %s17 = sshll.u32 [#allocation2], 4
      %s18 = int_to_ptr.vmem [resolvable:$true] %s17
      %20 = dma.hbm_to_vmem [thread:$0]  %s0, 128, %s18, [#allocation3]
    $region5: #{tpu_custom_call.1} parent=1 // pred_fallthru
      _
    // Predicated region
    $region6: #{tpu_custom_call.1} parent=1 // pred_check
      _
    $region7: #{tpu_custom_call.1} parent=1 // pred_check_branch
      %22 = sbr.rel (0) target = $region9
    $region8: #{tpu_custom_call.1} parent=1 // pred_region
      %s24 = ssub.s32 256, 256
      %25 = vsyncadd [#allocation6], %s24
      %s27 = sshll.u32 [#allocation5], 4
      %s28 = int_to_ptr.vmem [resolvable:$true] %s27
      %30 = dma.hbm_to_vmem [thread:$0]  %s1, 256, %s28, [#allocation6]
    $region9: #{tpu_custom_call.1} parent=1 // pred_fallthru
      _
    // Predicated region
    $region10: #{tpu_custom_call.1} parent=1 // pred_check
      _
    $region11: #{tpu_custom_call.1} parent=1 // pred_check_branch
      %32 = sbr.rel (0) target = $region13
    $region12: #{tpu_custom_call.1} parent=1 // pred_region
      _
    $region13: #{tpu_custom_call.1} parent=1 // pred_fallthru
      _
    // Predicated region
    $region14: #{tpu_custom_call.1} parent=1 // pred_check
      _
    $region15: #{tpu_custom_call.1} parent=1 // pred_check_branch
      %34 = sbr.rel (0) target = $region17
    $region16: #{tpu_custom_call.1} parent=1 // pred_region
      %35 = dma.done [#allocation3], 128
    $region17: #{tpu_custom_call.1} parent=1 // pred_fallthru
      _
    // Predicated region
    $region18: #{tpu_custom_call.1} parent=1 // pred_check
      _
    $region19: #{tpu_custom_call.1} parent=1 // pred_check_branch
      %37 = sbr.rel (0) target = $region21
    $region20: #{tpu_custom_call.1} parent=1 // pred_region
      %38 = dma.done [#allocation6], 256
    $region21: #{tpu_custom_call.1} parent=1 // pred_fallthru
      _
    %v39 = vld [vmem:[#allocation2] sm:$0xff]
    %v40 = vld [vmem:[#allocation5] sm:$0xff]
    %v41 = vld [vmem:[#allocation5 + $0x8] sm:$0xff]
    %v42 = vld [vmem:[%s2] sm:$0x3]
    %v44 = vlaneseq
    %v45 = vshrl.u32 %v44, 7
    %v46 = vsub.s32 0, %v45
    %v47 = vrot.slane %v42, %v46
    %v48 = vlaneseq
    %v49 = vshrl.u32 %v48, 7
    %v50 = vsub.s32 1, %v49
    %v51 = vrot.slane %v42, %v50
    %vm54 = vcmask 64512
    %v56 = vsel %vm54, %v39, 0
    %v58 = vand.u32 %v41, 4294901760
    %59 = vmatprep.subr.mxu0 %v58
    %v60 = vand.u32 %v40, 4294901760
    %61 = vmatpush1.msra.mxu0 %v60
    %62 = vmatprep.subr.mxu0 0.0
    %63 = vmatpush1.msra.mxu0 0.0
    %64 = vmatprep.subr.mxu0 0.0
    %65 = vmatpush1.msra.mxu0 0.0
    %66 = vmatprep.subr.mxu0 0.0
    %67 = vmatpush1.msra.mxu0 0.0
    %68 = vmatprep.subr.mxu0 0.0
    %69 = vmatpush1.msra.mxu0 0.0
    %70 = vmatprep.subr.mxu0 0.0
    %71 = vmatpush1.msra.mxu0 0.0
    %72 = vmatprep.subr.mxu0 0.0
    %73 = vmatpush1.msra.mxu0 0.0
    %74 = vmatprep.subr.mxu0 0.0
    %75 = vmatpush1.msra.mxu0 0.0
    %76 = vmatprep.subr.mxu0 0.0
    %77 = vmatpush1.msra.mxu0 0.0
    %78 = vmatprep.subr.mxu0 0.0
    %79 = vmatpush1.msra.mxu0 0.0
    %80 = vmatprep.subr.mxu0 0.0
    %81 = vmatpush1.msra.mxu0 0.0
    %82 = vmatprep.subr.mxu0 0.0
    %83 = vmatpush1.msra.mxu0 0.0
    %84 = vmatprep.subr.mxu0 0.0
    %85 = vmatpush1.msra.mxu0 0.0
    %86 = vmatprep.subr.mxu0 0.0
    %87 = vmatpush1.msra.mxu0 0.0
    %88 = vmatprep.subr.mxu0 0.0
    %89 = vmatpush1.msra.mxu0 0.0
    %90 = vmatprep.subr.mxu0 0.0
    %91 = vmatpush1.msra.mxu0 0.0
    %92 = vmatprep.subr.mxu0 0.0
    %93 = vmatpush1.msra.mxu0 0.0
    %94 = vmatprep.subr.mxu0 0.0
    %95 = vmatpush1.msra.mxu0 0.0
    %96 = vmatprep.subr.mxu0 0.0
    %97 = vmatpush1.msra.mxu0 0.0
    %98 = vmatprep.subr.mxu0 0.0
    %99 = vmatpush1.msra.mxu0 0.0
    %100 = vmatprep.subr.mxu0 0.0
    %101 = vmatpush1.msra.mxu0 0.0
    %102 = vmatprep.subr.mxu0 0.0
    %103 = vmatpush1.msra.mxu0 0.0
    %104 = vmatprep.subr.mxu0 0.0
    %105 = vmatpush1.msra.mxu0 0.0
    %106 = vmatprep.subr.mxu0 0.0
    %107 = vmatpush1.msra.mxu0 0.0
    %108 = vmatprep.subr.mxu0 0.0
    %109 = vmatpush1.msra.mxu0 0.0
    %110 = vmatprep.subr.mxu0 0.0
    %111 = vmatpush1.msra.mxu0 0.0
    %112 = vmatprep.subr.mxu0 0.0
    %113 = vmatpush1.msra.mxu0 0.0
    %114 = vmatprep.subr.mxu0 0.0
    %115 = vmatpush1.msra.mxu0 0.0
    %116 = vmatprep.subr.mxu0 0.0
    %117 = vmatpush1.msra.mxu0 0.0
    %118 = vmatprep.subr.mxu0 0.0
    %119 = vmatpush1.msra.mxu0 0.0
    %120 = vmatprep.subr.mxu0 0.0
    %121 = vmatpush1.msra.mxu0 0.0
    %122 = vmatprep.subr.mxu0 0.0
    %123 = vmatpush1.msra.mxu0 0.0
    %124 = vmatprep.mubr.f32.mxu0 0.0
    %v125 = vand.u32 %v56, 4294901760
    %v126 = vsub.f32 %v56, %v125
    %v127 = vand.u32 %v126, 4294901760
    %v128 = vsub.f32 %v126, %v127
    %v129 = vand.u32 %v128, 4294901760
    %130 = vmatmul.mubr.f32.gmra.mrb[0].mxu0 %v129
    %v131 = vpop.f32.mrb[0].mxu0
    %v132 = vadd.f32 %v47, %v131
    %v133 = vpop.f32.mrb[0].mxu0
    %v134 = vadd.f32 %v51, %v133
    %135 = vdwg.mxu0
    %v136 = vand.u32 %v41, 4294901760
    %v137 = vsub.f32 %v41, %v136
    %v138 = vand.u32 %v137, 4294901760
    %v139 = vsub.f32 %v137, %v138
    %v140 = vand.u32 %v139, 4294901760
    %141 = vmatprep.subr.mxu0 %v140
    %v142 = vand.u32 %v40, 4294901760
    %v143 = vsub.f32 %v40, %v142
    %v144 = vand.u32 %v143, 4294901760
    %v145 = vsub.f32 %v143, %v144
    %v146 = vand.u32 %v145, 4294901760
    %147 = vmatpush1.msra.mxu0 %v146
    %148 = vmatprep.subr.mxu0 0.0
    %149 = vmatpush1.msra.mxu0 0.0
    %150 = vmatprep.subr.mxu0 0.0
    %151 = vmatpush1.msra.mxu0 0.0
    %152 = vmatprep.subr.mxu0 0.0
    %153 = vmatpush1.msra.mxu0 0.0
    %154 = vmatprep.subr.mxu0 0.0
    %155 = vmatpush1.msra.mxu0 0.0
    %156 = vmatprep.subr.mxu0 0.0
    %157 = vmatpush1.msra.mxu0 0.0
    %158 = vmatprep.subr.mxu0 0.0
    %159 = vmatpush1.msra.mxu0 0.0
    %160 = vmatprep.subr.mxu0 0.0
    %161 = vmatpush1.msra.mxu0 0.0
    %162 = vmatprep.subr.mxu0 0.0
    %163 = vmatpush1.msra.mxu0 0.0
    %164 = vmatprep.subr.mxu0 0.0
    %165 = vmatpush1.msra.mxu0 0.0
    %166 = vmatprep.subr.mxu0 0.0
    %167 = vmatpush1.msra.mxu0 0.0
    %168 = vmatprep.subr.mxu0 0.0
    %169 = vmatpush1.msra.mxu0 0.0
    %170 = vmatprep.subr.mxu0 0.0
    %171 = vmatpush1.msra.mxu0 0.0
    %172 = vmatprep.subr.mxu0 0.0
    %173 = vmatpush1.msra.mxu0 0.0
    %174 = vmatprep.subr.mxu0 0.0
    %175 = vmatpush1.msra.mxu0 0.0
    %176 = vmatprep.subr.mxu0 0.0
    %177 = vmatpush1.msra.mxu0 0.0
    %178 = vmatprep.subr.mxu0 0.0
    %179 = vmatpush1.msra.mxu0 0.0
    %180 = vmatprep.subr.mxu0 0.0
    %181 = vmatpush1.msra.mxu0 0.0
    %182 = vmatprep.subr.mxu0 0.0
    %183 = vmatpush1.msra.mxu0 0.0
    %184 = vmatprep.subr.mxu0 0.0
    %185 = vmatpush1.msra.mxu0 0.0
    %186 = vmatprep.subr.mxu0 0.0
    %187 = vmatpush1.msra.mxu0 0.0
    %188 = vmatprep.subr.mxu0 0.0
    %189 = vmatpush1.msra.mxu0 0.0
    %190 = vmatprep.subr.mxu0 0.0
    %191 = vmatpush1.msra.mxu0 0.0
    %192 = vmatprep.subr.mxu0 0.0
    %193 = vmatpush1.msra.mxu0 0.0
    %194 = vmatprep.subr.mxu0 0.0
    %195 = vmatpush1.msra.mxu0 0.0
    %196 = vmatprep.subr.mxu0 0.0
    %197 = vmatpush1.msra.mxu0 0.0
    %198 = vmatprep.subr.mxu0 0.0
    %199 = vmatpush1.msra.mxu0 0.0
    %200 = vmatprep.subr.mxu0 0.0
    %201 = vmatpush1.msra.mxu0 0.0
    %202 = vmatprep.subr.mxu0 0.0
    %203 = vmatpush1.msra.mxu0 0.0
    %204 = vmatprep.subr.mxu0 0.0
    %205 = vmatpush1.msra.mxu0 0.0
    %206 = vmatprep.subr.mxu0 0.0
    %207 = vmatpush1.msra.mxu0 0.0
    %208 = vmatprep.subr.mxu0 0.0
    %209 = vmatpush1.msra.mxu0 0.0
    %210 = vmatprep.mubr.f32.mxu0 0.0
    %v211 = vand.u32 %v56, 4294901760
    %212 = vmatmul.mubr.f32.gmra.mrb[0].mxu0 %v211
    %v213 = vpop.f32.mrb[0].mxu0
    %v214 = vadd.f32 %v132, %v213
    %v215 = vpop.f32.mrb[0].mxu0
    %v216 = vadd.f32 %v134, %v215
    %217 = vdwg.mxu0
    %v218 = vand.u32 %v41, 4294901760
    %v219 = vsub.f32 %v41, %v218
    %220 = vmatprep.subr.mxu0 %v219
    %v221 = vand.u32 %v40, 4294901760
    %v222 = vsub.f32 %v40, %v221
    %223 = vmatpush1.msra.mxu0 %v222
    %224 = vmatprep.subr.mxu0 0.0
    %225 = vmatpush1.msra.mxu0 0.0
    %226 = vmatprep.subr.mxu0 0.0
    %227 = vmatpush1.msra.mxu0 0.0
    %228 = vmatprep.subr.mxu0 0.0
    %229 = vmatpush1.msra.mxu0 0.0
    %230 = vmatprep.subr.mxu0 0.0
    %231 = vmatpush1.msra.mxu0 0.0
    %232 = vmatprep.subr.mxu0 0.0
    %233 = vmatpush1.msra.mxu0 0.0
    %234 = vmatprep.subr.mxu0 0.0
    %235 = vmatpush1.msra.mxu0 0.0
    %236 = vmatprep.subr.mxu0 0.0
    %237 = vmatpush1.msra.mxu0 0.0
    %238 = vmatprep.subr.mxu0 0.0
    %239 = vmatpush1.msra.mxu0 0.0
    %240 = vmatprep.subr.mxu0 0.0
    %241 = vmatpush1.msra.mxu0 0.0
    %242 = vmatprep.subr.mxu0 0.0
    %243 = vmatpush1.msra.mxu0 0.0
    %244 = vmatprep.subr.mxu0 0.0
    %245 = vmatpush1.msra.mxu0 0.0
    %246 = vmatprep.subr.mxu0 0.0
    %247 = vmatpush1.msra.mxu0 0.0
    %248 = vmatprep.subr.mxu0 0.0
    %249 = vmatpush1.msra.mxu0 0.0
    %250 = vmatprep.subr.mxu0 0.0
    %251 = vmatpush1.msra.mxu0 0.0
    %252 = vmatprep.subr.mxu0 0.0
    %253 = vmatpush1.msra.mxu0 0.0
    %254 = vmatprep.subr.mxu0 0.0
    %255 = vmatpush1.msra.mxu0 0.0
    %256 = vmatprep.subr.mxu0 0.0
    %257 = vmatpush1.msra.mxu0 0.0
    %258 = vmatprep.subr.mxu0 0.0
    %259 = vmatpush1.msra.mxu0 0.0
    %260 = vmatprep.subr.mxu0 0.0
    %261 = vmatpush1.msra.mxu0 0.0
    %262 = vmatprep.subr.mxu0 0.0
    %263 = vmatpush1.msra.mxu0 0.0
    %264 = vmatprep.subr.mxu0 0.0
    %265 = vmatpush1.msra.mxu0 0.0
    %266 = vmatprep.subr.mxu0 0.0
    %267 = vmatpush1.msra.mxu0 0.0
    %268 = vmatprep.subr.mxu0 0.0
    %269 = vmatpush1.msra.mxu0 0.0
    %270 = vmatprep.subr.mxu0 0.0
    %271 = vmatpush1.msra.mxu0 0.0
    %272 = vmatprep.subr.mxu0 0.0
    %273 = vmatpush1.msra.mxu0 0.0
    %274 = vmatprep.subr.mxu0 0.0
    %275 = vmatpush1.msra.mxu0 0.0
    %276 = vmatprep.subr.mxu0 0.0
    %277 = vmatpush1.msra.mxu0 0.0
    %278 = vmatprep.subr.mxu0 0.0
    %279 = vmatpush1.msra.mxu0 0.0
    %280 = vmatprep.subr.mxu0 0.0
    %281 = vmatpush1.msra.mxu0 0.0
    %282 = vmatprep.subr.mxu0 0.0
    %283 = vmatpush1.msra.mxu0 0.0
    %284 = vmatprep.subr.mxu0 0.0
    %285 = vmatpush1.msra.mxu0 0.0
    %286 = vmatprep.mubr.f32.mxu0 0.0
    %v287 = vand.u32 %v56, 4294901760
    %v288 = vsub.f32 %v56, %v287
    %289 = vmatmul.mubr.f32.gmra.mrb[0].mxu0 %v288
    %v290 = vpop.f32.mrb[0].mxu0
    %v291 = vadd.f32 %v214, %v290
    %v292 = vpop.f32.mrb[0].mxu0
    %v293 = vadd.f32 %v216, %v292
    %294 = vdwg.mxu0
    %v295 = vand.u32 %v41, 4294901760
    %296 = vmatprep.subr.mxu0 %v295
    %v297 = vand.u32 %v40, 4294901760
    %298 = vmatpush1.msra.mxu0 %v297
    %299 = vmatprep.subr.mxu0 0.0
    %300 = vmatpush1.msra.mxu0 0.0
    %301 = vmatprep.subr.mxu0 0.0
    %302 = vmatpush1.msra.mxu0 0.0
    %303 = vmatprep.subr.mxu0 0.0
    %304 = vmatpush1.msra.mxu0 0.0
    %305 = vmatprep.subr.mxu0 0.0
    %306 = vmatpush1.msra.mxu0 0.0
    %307 = vmatprep.subr.mxu0 0.0
    %308 = vmatpush1.msra.mxu0 0.0
    %309 = vmatprep.subr.mxu0 0.0
    %310 = vmatpush1.msra.mxu0 0.0
    %311 = vmatprep.subr.mxu0 0.0
    %312 = vmatpush1.msra.mxu0 0.0
    %313 = vmatprep.subr.mxu0 0.0
    %314 = vmatpush1.msra.mxu0 0.0
    %315 = vmatprep.subr.mxu0 0.0
    %316 = vmatpush1.msra.mxu0 0.0
    %317 = vmatprep.subr.mxu0 0.0
    %318 = vmatpush1.msra.mxu0 0.0
    %319 = vmatprep.subr.mxu0 0.0
    %320 = vmatpush1.msra.mxu0 0.0
    %321 = vmatprep.subr.mxu0 0.0
    %322 = vmatpush1.msra.mxu0 0.0
    %323 = vmatprep.subr.mxu0 0.0
    %324 = vmatpush1.msra.mxu0 0.0
    %325 = vmatprep.subr.mxu0 0.0
    %326 = vmatpush1.msra.mxu0 0.0
    %327 = vmatprep.subr.mxu0 0.0
    %328 = vmatpush1.msra.mxu0 0.0
    %329 = vmatprep.subr.mxu0 0.0
    %330 = vmatpush1.msra.mxu0 0.0
    %331 = vmatprep.subr.mxu0 0.0
    %332 = vmatpush1.msra.mxu0 0.0
    %333 = vmatprep.subr.mxu0 0.0
    %334 = vmatpush1.msra.mxu0 0.0
    %335 = vmatprep.subr.mxu0 0.0
    %336 = vmatpush1.msra.mxu0 0.0
    %337 = vmatprep.subr.mxu0 0.0
    %338 = vmatpush1.msra.mxu0 0.0
    %339 = vmatprep.subr.mxu0 0.0
    %340 = vmatpush1.msra.mxu0 0.0
    %341 = vmatprep.subr.mxu0 0.0
    %342 = vmatpush1.msra.mxu0 0.0
    %343 = vmatprep.subr.mxu0 0.0
    %344 = vmatpush1.msra.mxu0 0.0
    %345 = vmatprep.subr.mxu0 0.0
    %346 = vmatpush1.msra.mxu0 0.0
    %347 = vmatprep.subr.mxu0 0.0
    %348 = vmatpush1.msra.mxu0 0.0
    %349 = vmatprep.subr.mxu0 0.0
    %350 = vmatpush1.msra.mxu0 0.0
    %351 = vmatprep.subr.mxu0 0.0
    %352 = vmatpush1.msra.mxu0 0.0
    %353 = vmatprep.subr.mxu0 0.0
    %354 = vmatpush1.msra.mxu0 0.0
    %355 = vmatprep.subr.mxu0 0.0
    %356 = vmatpush1.msra.mxu0 0.0
    %357 = vmatprep.subr.mxu0 0.0
    %358 = vmatpush1.msra.mxu0 0.0
    %359 = vmatprep.subr.mxu0 0.0
    %360 = vmatpush1.msra.mxu0 0.0
    %361 = vmatprep.mubr.f32.mxu0 0.0
    %v362 = vand.u32 %v56, 4294901760
    %v363 = vsub.f32 %v56, %v362
    %v364 = vand.u32 %v363, 4294901760
    %365 = vmatmul.mubr.f32.gmra.mrb[0].mxu0 %v364
    %v366 = vpop.f32.mrb[0].mxu0
    %v367 = vadd.f32 %v291, %v366
    %v368 = vpop.f32.mrb[0].mxu0
    %v369 = vadd.f32 %v293, %v368
    %370 = vdwg.mxu0
    %v371 = vand.u32 %v41, 4294901760
    %v372 = vsub.f32 %v41, %v371
    %v373 = vand.u32 %v372, 4294901760
    %374 = vmatprep.subr.mxu0 %v373
    %v375 = vand.u32 %v40, 4294901760
    %v376 = vsub.f32 %v40, %v375
    %v377 = vand.u32 %v376, 4294901760
    %378 = vmatpush1.msra.mxu0 %v377
    %379 = vmatprep.subr.mxu0 0.0
    %380 = vmatpush1.msra.mxu0 0.0
    %381 = vmatprep.subr.mxu0 0.0
    %382 = vmatpush1.msra.mxu0 0.0
    %383 = vmatprep.subr.mxu0 0.0
    %384 = vmatpush1.msra.mxu0 0.0
    %385 = vmatprep.subr.mxu0 0.0
    %386 = vmatpush1.msra.mxu0 0.0
    %387 = vmatprep.subr.mxu0 0.0
    %388 = vmatpush1.msra.mxu0 0.0
    %389 = vmatprep.subr.mxu0 0.0
    %390 = vmatpush1.msra.mxu0 0.0
    %391 = vmatprep.subr.mxu0 0.0
    %392 = vmatpush1.msra.mxu0 0.0
    %393 = vmatprep.subr.mxu0 0.0
    %394 = vmatpush1.msra.mxu0 0.0
    %395 = vmatprep.subr.mxu0 0.0
    %396 = vmatpush1.msra.mxu0 0.0
    %397 = vmatprep.subr.mxu0 0.0
    %398 = vmatpush1.msra.mxu0 0.0
    %399 = vmatprep.subr.mxu0 0.0
    %400 = vmatpush1.msra.mxu0 0.0
    %401 = vmatprep.subr.mxu0 0.0
    %402 = vmatpush1.msra.mxu0 0.0
    %403 = vmatprep.subr.mxu0 0.0
    %404 = vmatpush1.msra.mxu0 0.0
    %405 = vmatprep.subr.mxu0 0.0
    %406 = vmatpush1.msra.mxu0 0.0
    %407 = vmatprep.subr.mxu0 0.0
    %408 = vmatpush1.msra.mxu0 0.0
    %409 = vmatprep.subr.mxu0 0.0
    %410 = vmatpush1.msra.mxu0 0.0
    %411 = vmatprep.subr.mxu0 0.0
    %412 = vmatpush1.msra.mxu0 0.0
    %413 = vmatprep.subr.mxu0 0.0
    %414 = vmatpush1.msra.mxu0 0.0
    %415 = vmatprep.subr.mxu0 0.0
    %416 = vmatpush1.msra.mxu0 0.0
    %417 = vmatprep.subr.mxu0 0.0
    %418 = vmatpush1.msra.mxu0 0.0
    %419 = vmatprep.subr.mxu0 0.0
    %420 = vmatpush1.msra.mxu0 0.0
    %421 = vmatprep.subr.mxu0 0.0
    %422 = vmatpush1.msra.mxu0 0.0
    %423 = vmatprep.subr.mxu0 0.0
    %424 = vmatpush1.msra.mxu0 0.0
    %425 = vmatprep.subr.mxu0 0.0
    %426 = vmatpush1.msra.mxu0 0.0
    %427 = vmatprep.subr.mxu0 0.0
    %428 = vmatpush1.msra.mxu0 0.0
    %429 = vmatprep.subr.mxu0 0.0
    %430 = vmatpush1.msra.mxu0 0.0
    %431 = vmatprep.subr.mxu0 0.0
    %432 = vmatpush1.msra.mxu0 0.0
    %433 = vmatprep.subr.mxu0 0.0
    %434 = vmatpush1.msra.mxu0 0.0
    %435 = vmatprep.subr.mxu0 0.0
    %436 = vmatpush1.msra.mxu0 0.0
    %437 = vmatprep.subr.mxu0 0.0
    %438 = vmatpush1.msra.mxu0 0.0
    %439 = vmatprep.subr.mxu0 0.0
    %440 = vmatpush1.msra.mxu0 0.0
    %441 = vmatprep.mubr.f32.mxu0 0.0
    %v442 = vand.u32 %v56, 4294901760
    %443 = vmatmul.mubr.f32.gmra.mrb[0].mxu0 %v442
    %v444 = vpop.f32.mrb[0].mxu0
    %v445 = vadd.f32 %v367, %v444
    %v446 = vpop.f32.mrb[0].mxu0
    %v447 = vadd.f32 %v369, %v446
    %448 = vdwg.mxu0
    %v449 = vand.u32 %v41, 4294901760
    %450 = vmatprep.subr.mxu0 %v449
    %v451 = vand.u32 %v40, 4294901760
    %452 = vmatpush1.msra.mxu0 %v451
    %453 = vmatprep.subr.mxu0 0.0
    %454 = vmatpush1.msra.mxu0 0.0
    %455 = vmatprep.subr.mxu0 0.0
    %456 = vmatpush1.msra.mxu0 0.0
    %457 = vmatprep.subr.mxu0 0.0
    %458 = vmatpush1.msra.mxu0 0.0
    %459 = vmatprep.subr.mxu0 0.0
    %460 = vmatpush1.msra.mxu0 0.0
    %461 = vmatprep.subr.mxu0 0.0
    %462 = vmatpush1.msra.mxu0 0.0
    %463 = vmatprep.subr.mxu0 0.0
    %464 = vmatpush1.msra.mxu0 0.0
    %465 = vmatprep.subr.mxu0 0.0
    %466 = vmatpush1.msra.mxu0 0.0
    %467 = vmatprep.subr.mxu0 0.0
    %468 = vmatpush1.msra.mxu0 0.0
    %469 = vmatprep.subr.mxu0 0.0
    %470 = vmatpush1.msra.mxu0 0.0
    %471 = vmatprep.subr.mxu0 0.0
    %472 = vmatpush1.msra.mxu0 0.0
    %473 = vmatprep.subr.mxu0 0.0
    %474 = vmatpush1.msra.mxu0 0.0
    %475 = vmatprep.subr.mxu0 0.0
    %476 = vmatpush1.msra.mxu0 0.0
    %477 = vmatprep.subr.mxu0 0.0
    %478 = vmatpush1.msra.mxu0 0.0
    %479 = vmatprep.subr.mxu0 0.0
    %480 = vmatpush1.msra.mxu0 0.0
    %481 = vmatprep.subr.mxu0 0.0
    %482 = vmatpush1.msra.mxu0 0.0
    %483 = vmatprep.subr.mxu0 0.0
    %484 = vmatpush1.msra.mxu0 0.0
    %485 = vmatprep.subr.mxu0 0.0
    %486 = vmatpush1.msra.mxu0 0.0
    %487 = vmatprep.subr.mxu0 0.0
    %488 = vmatpush1.msra.mxu0 0.0
    %489 = vmatprep.subr.mxu0 0.0
    %490 = vmatpush1.msra.mxu0 0.0
    %491 = vmatprep.subr.mxu0 0.0
    %492 = vmatpush1.msra.mxu0 0.0
    %493 = vmatprep.subr.mxu0 0.0
    %494 = vmatpush1.msra.mxu0 0.0
    %495 = vmatprep.subr.mxu0 0.0
    %496 = vmatpush1.msra.mxu0 0.0
    %497 = vmatprep.subr.mxu0 0.0
    %498 = vmatpush1.msra.mxu0 0.0
    %499 = vmatprep.subr.mxu0 0.0
    %500 = vmatpush1.msra.mxu0 0.0
    %501 = vmatprep.subr.mxu0 0.0
    %502 = vmatpush1.msra.mxu0 0.0
    %503 = vmatprep.subr.mxu0 0.0
    %504 = vmatpush1.msra.mxu0 0.0
    %505 = vmatprep.subr.mxu0 0.0
    %506 = vmatpush1.msra.mxu0 0.0
    %507 = vmatprep.subr.mxu0 0.0
    %508 = vmatpush1.msra.mxu0 0.0
    %509 = vmatprep.subr.mxu0 0.0
    %510 = vmatpush1.msra.mxu0 0.0
    %511 = vmatprep.subr.mxu0 0.0
    %512 = vmatpush1.msra.mxu0 0.0
    %513 = vmatprep.subr.mxu0 0.0
    %514 = vmatpush1.msra.mxu0 0.0
    %515 = vmatprep.mubr.f32.mxu0 0.0
    %v516 = vand.u32 %v56, 4294901760
    %517 = vmatmul.mubr.f32.gmra.mrb[0].mxu0 %v516
    %v518 = vpop.f32.mrb[0].mxu0
    %v519 = vadd.f32 %v445, %v518
    %v520 = vpop.f32.mrb[0].mxu0
    %v521 = vadd.f32 %v447, %v520
    %522 = vdwg.mxu0
    %v523 = vand.u32 2147483647, %v519
    %vm524 = vcmp.le.f32.partialorder %v523, 0.7853982
    %vm525 = vcmp.lt.s32.totalorder %v519, 0
    %v526 = vand.u32 %v519, 2139095040
    %v527 = vshrl.u32 %v526, 23
    %v528 = vsub.s32 %v527, 127
    %v529 = vand.u32 2147483647, %v519
    %v530 = vand.u32 %v529, 8388607
    %v531 = vor.u32 %v530, 8388608
    %v532 = vsub.s32 0, %v531
    %v533 = vadd.s32 %v528, 1
    %vm534 = vcmp.gt.s32.totalorder %v533, 0
    %v535 = vsel %vm534, %v533, 0
    %v536 = vshrl.u32 %v535, 5
    %v537 = vand.u32 %v535, 31
    %v538 = vsub.s32 32, %v537
    %v539 = vshrl.u32 683565275, %v538
    %v540 = vshll.u32 683565275, %v537
    %v541 = vshrl.u32 2475754826, %v538
    %v542 = vor.u32 %v540, %v541
    %v543 = vshll.u32 2475754826, %v537
    %v544 = vshrl.u32 2131351028, %v538
    %v545 = vor.u32 %v543, %v544
    %v546 = vshll.u32 2131351028, %v537
    %v547 = vshrl.u32 2102212464, %v538
    %v548 = vor.u32 %v546, %v547
    %v549 = vshll.u32 2102212464, %v537
    %v550 = vshrl.u32 920167782, %v538
    %v551 = vor.u32 %v549, %v550
    %v552 = vshll.u32 920167782, %v537
    %v553 = vshrl.u32 1326507024, %v538
    %v554 = vor.u32 %v552, %v553
    %vm555 = vcmp.lt.s32.totalorder %v536, 1
    %vm556 = vcmp.lt.s32.totalorder %v536, 2
    %vm557 = vcmp.lt.s32.totalorder %v536, 3
    %vm558 = vcmp.lt.s32.totalorder %v536, 4
    %v559 = vsel %vm555, %v539, %v542
    %v560 = vsel %vm558, %v548, 2102212464
    %v561 = vsel %vm557, %v545, %v560
    %v562 = vsel %vm556, %v559, %v561
    %v563 = vsel %vm555, %v542, %v545
    %v564 = vsel %vm558, %v551, 920167782
    %v565 = vsel %vm557, %v548, %v564
    %v566 = vsel %vm556, %v563, %v565
    %v567 = vsel %vm555, %v545, %v548
    %v568 = vsel %vm558, %v554, 1326507024
    %v569 = vsel %vm557, %v551, %v568
    %v570 = vsel %vm556, %v567, %v569
    %v571 = vshll.u32 %v531, 8
    %v572 = vmul.u32.u64.compose %v571, %v570
    %v573 = vextract.low.u32 %v572
    %v574 = vextract.high.u32 %v572
    %v575 = vmul.u32.u64.compose %v571, %v566
    %v576 = vextract.low.u32 %v575
    %v577 = vextract.high.u32 %v575
    %v578 = vmul.u32 %v571, %v562
    %v579 = vadd.s32 %v574, %v576
    %vm580 = vc.u32 %v574, %v576
    %v581 = vadd.s32 %v577, 1
    %v582 = vsel %vm580, %v581, %v577
    %v583 = vadd.s32 %v578, %v582
    %v584 = vadd.s32 %v583, 536870912
    %v585 = vshrl.u32 %v584, 30
    %v586 = vshll.u32 %v585, 30
    %v587 = vsub.s32 %v583, %v586
    %vm588 = vcmp.lt.s32.totalorder %v587, 0
    %v589 = vsub.s32 0, %v587
    %v590 = vsel %vm588, %v589, %v587
    %v591 = vclz %v590
    %v592 = vsub.s32 %v591, 2
    %vm593 = vcmp.gt.s32.totalorder 0, %v592
    %v594 = vsel %vm593, 0, %v592
    %v595 = vsub.s32 32, %v594
    %v596 = vshll.u32 %v587, %v594
    %v597 = vshrl.u32 %v579, %v595
    %v598 = vor.u32 %v596, %v597
    %v599 = vsub.s32 4294967266, %v594
    %v600 = vadd.s32 %v599, 127
    %v601 = vshll.u32 %v600, 23
    %v602 = vor.u32 4788187, %v601
    %v603 = vand.u32 2147483647, %v602
    %v605 = vcvt.s32.f32 %v598
    %v606 = vmul.f32 %v605, %v603
    %v607 = vxor.u32 %v606, 2147483648
    %v608 = vsel %vm525, %v607, %v606
    %v609 = vsub.s32 4, %v585
    %v610 = vsel %vm525, %v609, %v585
    %v611 = vsel %vm524, %v519, %v608
    %v612 = vsel %vm524, 0, %v610
    %v613 = vcosq.f32.pop %v611
    %v614 = vsinq.f32.pop %v611
    %vm615 = vweird.f32 %v519
    %v616 = vand.u32 %v612, 3
    %vm617 = vcmp.lt.s32.totalorder %v616, 2
    %vm618 = vcmp.eq.s32.totalorder %v616, 0
    %v619 = vxor.u32 %v614, 2147483648
    %v620 = vsel %vm618, %v613, %v619
    %vm621 = vcmp.eq.s32.totalorder %v616, 2
    %v622 = vxor.u32 %v613, 2147483648
    %v623 = vsel %vm621, %v622, %v614
    %v624 = vsel %vm617, %v620, %v623
    %v625 = vsel %vm615, nan, %v624
    %v626 = vand.u32 2147483647, %v521
    %vm627 = vcmp.le.f32.partialorder %v626, 0.7853982
    %vm628 = vcmp.lt.s32.totalorder %v521, 0
    %v629 = vand.u32 %v521, 2139095040
    %v630 = vshrl.u32 %v629, 23
    %v631 = vsub.s32 %v630, 127
    %v632 = vand.u32 2147483647, %v521
    %v633 = vand.u32 %v632, 8388607
    %v634 = vor.u32 %v633, 8388608
    %v635 = vsub.s32 0, %v634
    %v636 = vadd.s32 %v631, 1
    %vm637 = vcmp.gt.s32.totalorder %v636, 0
    %v638 = vsel %vm637, %v636, 0
    %v639 = vshrl.u32 %v638, 5
    %v640 = vand.u32 %v638, 31
    %v641 = vsub.s32 32, %v640
    %v642 = vshrl.u32 683565275, %v641
    %v643 = vshll.u32 683565275, %v640
    %v644 = vshrl.u32 2475754826, %v641
    %v645 = vor.u32 %v643, %v644
    %v646 = vshll.u32 2475754826, %v640
    %v647 = vshrl.u32 2131351028, %v641
    %v648 = vor.u32 %v646, %v647
    %v649 = vshll.u32 2131351028, %v640
    %v650 = vshrl.u32 2102212464, %v641
    %v651 = vor.u32 %v649, %v650
    %v652 = vshll.u32 2102212464, %v640
    %v653 = vshrl.u32 920167782, %v641
    %v654 = vor.u32 %v652, %v653
    %v655 = vshll.u32 920167782, %v640
    %v656 = vshrl.u32 1326507024, %v641
    %v657 = vor.u32 %v655, %v656
    %vm658 = vcmp.lt.s32.totalorder %v639, 1
    %vm659 = vcmp.lt.s32.totalorder %v639, 2
    %vm660 = vcmp.lt.s32.totalorder %v639, 3
    %vm661 = vcmp.lt.s32.totalorder %v639, 4
    %v662 = vsel %vm658, %v642, %v645
    %v663 = vsel %vm661, %v651, 2102212464
    %v664 = vsel %vm660, %v648, %v663
    %v665 = vsel %vm659, %v662, %v664
    %v666 = vsel %vm658, %v645, %v648
    %v667 = vsel %vm661, %v654, 920167782
    %v668 = vsel %vm660, %v651, %v667
    %v669 = vsel %vm659, %v666, %v668
    %v670 = vsel %vm658, %v648, %v651
    %v671 = vsel %vm661, %v657, 1326507024
    %v672 = vsel %vm660, %v654, %v671
    %v673 = vsel %vm659, %v670, %v672
    %v674 = vshll.u32 %v634, 8
    %v675 = vmul.u32.u64.compose %v674, %v673
    %v676 = vextract.low.u32 %v675
    %v677 = vextract.high.u32 %v675
    %v678 = vmul.u32.u64.compose %v674, %v669
    %v679 = vextract.low.u32 %v678
    %v680 = vextract.high.u32 %v678
    %v681 = vmul.u32 %v674, %v665
    %v682 = vadd.s32 %v677, %v679
    %vm683 = vc.u32 %v677, %v679
    %v684 = vadd.s32 %v680, 1
    %v685 = vsel %vm683, %v684, %v680
    %v686 = vadd.s32 %v681, %v685
    %v687 = vadd.s32 %v686, 536870912
    %v688 = vshrl.u32 %v687, 30
    %v689 = vshll.u32 %v688, 30
    %v690 = vsub.s32 %v686, %v689
    %vm691 = vcmp.lt.s32.totalorder %v690, 0
    %v692 = vsub.s32 0, %v690
    %v693 = vsel %vm691, %v692, %v690
    %v694 = vclz %v693
    %v695 = vsub.s32 %v694, 2
    %vm696 = vcmp.gt.s32.totalorder 0, %v695
    %v697 = vsel %vm696, 0, %v695
    %v698 = vsub.s32 32, %v697
    %v699 = vshll.u32 %v690, %v697
    %v700 = vshrl.u32 %v682, %v698
    %v701 = vor.u32 %v699, %v700
    %v702 = vsub.s32 4294967266, %v697
    %v703 = vadd.s32 %v702, 127
    %v704 = vshll.u32 %v703, 23
    %v705 = vor.u32 4788187, %v704
    %v706 = vand.u32 2147483647, %v705
    %v708 = vcvt.s32.f32 %v701
    %v709 = vmul.f32 %v708, %v706
    %v710 = vxor.u32 %v709, 2147483648
    %v711 = vsel %vm628, %v710, %v709
    %v712 = vsub.s32 4, %v688
    %v713 = vsel %vm628, %v712, %v688
    %v714 = vsel %vm627, %v521, %v711
    %v715 = vsel %vm627, 0, %v713
    %v716 = vcosq.f32.pop %v714
    %v717 = vsinq.f32.pop %v714
    %vm718 = vweird.f32 %v521
    %v719 = vand.u32 %v715, 3
    %vm720 = vcmp.lt.s32.totalorder %v719, 2
    %vm721 = vcmp.eq.s32.totalorder %v719, 0
    %v722 = vxor.u32 %v717, 2147483648
    %v723 = vsel %vm721, %v716, %v722
    %vm724 = vcmp.eq.s32.totalorder %v719, 2
    %v725 = vxor.u32 %v716, 2147483648
    %v726 = vsel %vm724, %v725, %v717
    %v727 = vsel %vm720, %v723, %v726
    %v728 = vsel %vm718, nan, %v727
    %729 = vst [vmem:[#allocation7] sm:$0xff] %v625
    %730 = vst [vmem:[#allocation7 + $0x8] sm:$0xff] %v728
    // Predicated region
    $region22: #{tpu_custom_call.1} parent=1 // pred_check
      _
    $region23: #{tpu_custom_call.1} parent=1 // pred_check_branch
      %732 = sbr.rel (0) target = $region25
    $region24: #{tpu_custom_call.1} parent=1 // pred_region
      %s734 = ssub.s32 256, 256
      %735 = vsyncadd [#allocation4], %s734
      %s737 = sshll.u32 [#allocation7], 4
      %s738 = int_to_ptr.vmem [resolvable:$true] %s737
      %740 = dma.vmem_to_hbm [thread:$0]  %s738, 256, %s3, [#allocation4]
    $region25: #{tpu_custom_call.1} parent=1 // pred_fallthru
      _
    // Predicated region
    $region26: #{tpu_custom_call.1} parent=1 // pred_check
      _
    $region27: #{tpu_custom_call.1} parent=1 // pred_check_branch
      %742 = sbr.rel (0) target = $region29
    $region28: #{tpu_custom_call.1} parent=1 // pred_region
      %743 = dma.done [#allocation4], 256
    $region29: #{tpu_custom_call.1} parent=1 // pred_fallthru
      _
    %744 = vsyncpa [#allocation3], 1
    %745 = vsyncpa [#allocation6], 1
    %746 = vsyncpa [#allocation4], 1

</llo_original>
